<compile_context>
chip_gen: v5e
topology: v5e:2x2
jax: 0.10.0
libtpu: 0.0.40
codegen_flags: <defaults>
</compile_context>

<pallas_src>
import functools

import jax
import jax.numpy as jnp
from jax.experimental import pallas as pl
from jax.experimental.pallas import tpu as pltpu


def _make_pose_embed_kernel(bs: int):
    """Builds the per-frame-tile kernel (bs is static, loop unrolled at trace).

    Refs seen by the kernel:
      x_ref: (bs, TILE_T, K)   tile of the original (bs, T, F) input
      w_ref: (K, N)            full weight (resident across the grid)
      b_ref: (1, N)            bias
      o_ref: (TILE_T, bs*N)    lane-dense output tile; cols [b*N:(b+1)*N] = batch b
    """

    def kernel(x_ref, w_ref, b_ref, o_ref):
        w = w_ref[...]
        bias = b_ref[...].astype(jnp.float32)
        cols = []
        for b in range(bs):  # static, small; unrolled at trace time
            y = jnp.dot(x_ref[b], w, preferred_element_type=jnp.float32) + bias
            cols.append(y)
        out = cols[0] if bs == 1 else jnp.concatenate(cols, axis=-1)
        o_ref[...] = out.astype(o_ref.dtype)

    return kernel


@functools.partial(jax.jit, static_argnames=("tile_t",))
def input_process_forward(x, weight, bias, *, tile_t: int = 64):
    """x: (bs, T, F); weight: (F, N); bias: (N,)  ->  (T, bs, N)."""
    bs, nframes, n_features = x.shape
    assert nframes == 196  # matches the PyTorch module's assert (kernel itself is general)
    latent_dim = weight.shape[1]

    # Frame-tile size: multiple of 8 (sublane rule) unless it covers the whole axis.
    tile = min(tile_t, nframes)
    if tile != nframes:
        tile = max(8, (tile // 8) * 8)

    grid = (pl.cdiv(nframes, tile),)

    itemsize = jnp.dtype(x.dtype).itemsize
    cost = pl.CostEstimate(
        flops=2 * bs * nframes * n_features * latent_dim,
        transcendentals=0,
        bytes_accessed=(
            bs * nframes * n_features * itemsize       # x
            + n_features * latent_dim * itemsize       # weight
            + latent_dim * itemsize                    # bias
            + nframes * bs * latent_dim * itemsize     # out
        ),
    )

    out2d = pl.pallas_call(
        _make_pose_embed_kernel(bs),
        out_shape=jax.ShapeDtypeStruct((nframes, bs * latent_dim), x.dtype),
        grid=grid,
        in_specs=[
            # Read tiles directly from the un-permuted (bs, T, F) input.
            pl.BlockSpec((bs, tile, n_features), lambda t: (0, t, 0)),
            pl.BlockSpec((n_features, latent_dim), lambda t: (0, 0)),
            pl.BlockSpec((1, latent_dim), lambda t: (0, 0)),
        ],
        # Lane-dense output slab: bs*latent_dim lanes per row.
        out_specs=pl.BlockSpec((tile, bs * latent_dim), lambda t: (t, 0)),
        compiler_params=pltpu.CompilerParams(
            dimension_semantics=("parallel",),
        ),
        cost_estimate=cost,
    )(x, weight, bias.reshape(1, latent_dim))

    # Contiguous reshape (no data movement): (T, bs*N) -> (T, bs, N).
    return out2d.reshape(nframes, bs, latent_dim)


if __name__ == "__main__":
    # Small shapes consistent with the module (nframes fixed at 196 by its assert).
    bs = 2
    nframes = 196
    input_feats = 32
    latent_dim = 64

    key = jax.random.PRNGKey(0)
    kx, kw, kb = jax.random.split(key, 3)

    x = jax.random.normal(kx, (bs, nframes, input_feats), dtype=jnp.float32)
    # Deterministic synthetic parameters (nn.Linear(input_feats, latent_dim)).
    bound = 1.0 / (input_feats ** 0.5)
    weight = jax.random.uniform(kw, (input_feats, latent_dim), jnp.float32, -bound, bound)
    bias = jax.random.uniform(kb, (latent_dim,), jnp.float32, -bound, bound)

    out = input_process_forward(x, weight, bias)
    out = jax.block_until_ready(out)

    # Reference check against plain JAX (same math as the PyTorch forward).
    ref = jnp.transpose(x, (1, 0, 2)) @ weight + bias
    assert out.shape == (nframes, bs, latent_dim)
    assert jnp.allclose(out, ref, atol=1e-4, rtol=1e-4)

    print("KERNEL_OK")
</pallas_src>

<mosaic_0001>
module attributes {stable_mosaic.version = 11 : i64} {
  func.func @kernel(%arg0: i32, %arg1: memref<2x64x32xf32, #tpu.memory_space<vmem>>, %arg2: memref<32x64xf32, #tpu.memory_space<vmem>>, %arg3: memref<1x64xf32, #tpu.memory_space<vmem>>, %arg4: memref<64x128xf32, #tpu.memory_space<vmem>>) attributes {dimension_semantics = [#tpu.dimension_semantics<parallel>], iteration_bounds = array<i64: 4>, scalar_prefetch = 0 : i64, scratch_operands = 0 : i64, tpu.core_type = #tpu.core_type<tc>, window_params = [{transform_indices = @transform_0, window_bounds = array<i64: 2, 64, 32>}, {pipeline_mode = #tpu.pipeline_mode<synchronous>, transform_indices = @transform_1, window_bounds = array<i64: 32, 64>}, {pipeline_mode = #tpu.pipeline_mode<synchronous>, transform_indices = @transform_2, window_bounds = array<i64: 1, 64>}, {transform_indices = @transform_3, window_bounds = array<i64: 64, 128>}]} {
    %c0 = arith.constant 0 : index
    %c0_0 = arith.constant 0 : index
    %0 = vector.load %arg2[%c0, %c0_0] : memref<32x64xf32, #tpu.memory_space<vmem>>, vector<32x64xf32>
    %c0_1 = arith.constant 0 : index
    %c0_2 = arith.constant 0 : index
    %1 = vector.load %arg3[%c0_1, %c0_2] : memref<1x64xf32, #tpu.memory_space<vmem>>, vector<1x64xf32>
    %c0_3 = arith.constant 0 : index
    %c0_4 = arith.constant 0 : index
    %c0_5 = arith.constant 0 : index
    %2 = vector.load %arg1[%c0_3, %c0_4, %c0_5] : memref<2x64x32xf32, #tpu.memory_space<vmem>>, vector<1x64x32xf32>
    %3 = vector.shape_cast %2 : vector<1x64x32xf32> to vector<64x32xf32>
    %cst = arith.constant dense<0.000000e+00> : vector<64x64xf32>
    %4 = tpu.matmul %3, %0, %cst {dimension_numbers = #tpu.dot_dimension_numbers<[1], [0], [0], [1], [0, 0, 1, 1], [], []>} : vector<64x32xf32>, vector<32x64xf32>, vector<64x64xf32> -> vector<64x64xf32>
    %5 = vector.broadcast %1 : vector<1x64xf32> to vector<64x64xf32>
    %6 = arith.addf %4, %5 : vector<64x64xf32>
    %c1 = arith.constant 1 : index
    %c0_6 = arith.constant 0 : index
    %c0_7 = arith.constant 0 : index
    %7 = vector.load %arg1[%c1, %c0_6, %c0_7] : memref<2x64x32xf32, #tpu.memory_space<vmem>>, vector<1x64x32xf32>
    %8 = vector.shape_cast %7 : vector<1x64x32xf32> to vector<64x32xf32>
    %cst_8 = arith.constant dense<0.000000e+00> : vector<64x64xf32>
    %9 = tpu.matmul %8, %0, %cst_8 {dimension_numbers = #tpu.dot_dimension_numbers<[1], [0], [0], [1], [0, 0, 1, 1], [], []>} : vector<64x32xf32>, vector<32x64xf32>, vector<64x64xf32> -> vector<64x64xf32>
    %10 = vector.broadcast %1 : vector<1x64xf32> to vector<64x64xf32>
    %11 = arith.addf %9, %10 : vector<64x64xf32>
    %12 = tpu.concatenate %6, %11 in 1 : vector<64x64xf32>, vector<64x64xf32> -> vector<64x128xf32>
    %c0_9 = arith.constant 0 : index
    %c0_10 = arith.constant 0 : index
    %13 = vector.load %arg4[%c0_9, %c0_10] : memref<64x128xf32, #tpu.memory_space<vmem>>, vector<64x128xf32>
    tpu.vector_store %arg4[%c0_9, %c0_10], %12 {strides = array<i32>} : memref<64x128xf32, #tpu.memory_space<vmem>>, vector<64x128xf32>,
    return
  }
  func.func @transform_0(%arg0: i32) -> (i32, i32, i32) {
    %c0_i32 = arith.constant 0 : i32
    %c0_i32_0 = arith.constant 0 : i32
    %c0_i32_1 = arith.constant 0 : i32
    return %c0_i32, %arg0, %c0_i32_0 : i32, i32, i32
  }
  func.func @transform_1(%arg0: i32) -> (i32, i32) {
    %c0_i32 = arith.constant 0 : i32
    %c0_i32_0 = arith.constant 0 : i32
    %c0_i32_1 = arith.constant 0 : i32
    return %c0_i32, %c0_i32_0 : i32, i32
  }
  func.func @transform_2(%arg0: i32) -> (i32, i32) {
    %c0_i32 = arith.constant 0 : i32
    %c0_i32_0 = arith.constant 0 : i32
    %c0_i32_1 = arith.constant 0 : i32
    return %c0_i32, %c0_i32_0 : i32, i32
  }
  func.func @transform_3(%arg0: i32) -> (i32, i32) {
    %c0_i32 = arith.constant 0 : i32
    %c0_i32_0 = arith.constant 0 : i32
    return %arg0, %c0_i32 : i32, i32
  }
}

</mosaic_0001>

<llo_original>
// kernel: input_process_forward.1
$region0: #{input_process_forward.1}
  #allocation0 [shape = 'u32[]', space=smem, size = 0x4, offset = 0x4, fixed_abs, tag = 'smem constant byte address 0x4 - core index']
  #allocation1 [shape = 'u32[72,128]{1,0:T(1,128)}', space=vmem, size = 0x9000, scoped, tag = 'internal scratch']
  %s0 = inlined_call_operand.vmem [shape: f32[2,196,32], index: 0, kind: input, shape index: {}]
  %s1 = inlined_call_operand.vmem [shape: f32[32,64], index: 1, kind: input, shape index: {}]
  %s2 = inlined_call_operand.vmem [shape: f32[1,64], index: 2, kind: input, shape index: {}]
  %s3 = inlined_call_operand.vmem [shape: f32[196,128], index: 3, kind: output, shape index: {}]
  %s4 = sld [smem:[#allocation0]]
  $region145: #{input_process_forward.1} parent=0
    _
  %s6 = ssub.s32 1, %s4
  %s7 = scalar_select 0, %s6, %s4
  $region1: #{input_process_forward.1} parent=0
    #allocation2 [shape = 'u8[131072]{0}', space=vmem, size = 0x20000, scoped, tag = 'input window, operand 0']
    #allocation3 [shape = 'u8[65536]{0}', space=vmem, size = 0x10000, scoped, tag = 'output window, operand 0']
    loop: start=0, step=1, limit=6
    $region2: #{input_process_forward.1} parent=1 // loop_pre_header
      _
    $region3: #{input_process_forward.1} parent=1 // loop_header
      %s9 = sphi 0, %s13
      %p10 = scmp.ge.s32.totalorder %s9, 6
      %s19 = sphi 0, %s21
      %s22 = sphi 0, %s19
      %s23 = sphi 0, %s22
      %s39 = sphi 0, %s23
      %s43 = sphi 0, %s43
      %s45 = sphi 0, %s43
      %s46 = sphi 0, %s45
      %s60 = sphi 0, %s46
      %s64 = sphi 0, %s64
      %s66 = sphi 0, %s64
      %s67 = sphi 0, %s66
      %s81 = sphi 0, %s67
      %s87 = sphi 0, %s89
      %s90 = sphi 0, %s87
      %s91 = sphi 0, %s90
      %s107 = sphi 0, %s91
    $region4: #{input_process_forward.1} parent=1 // loop_header_branch
      %12 = sbr.rel (%p10) target = $region8
    $region5: #{input_process_forward.1} parent=1 // loop_body
      %s14 = ssub.s32 %s9, 1
      %s15 = ssub.s32 %s9, 2
      %s16 = sadd.s32 %s9, 1
      %s17 = ssub.s32 %s9, %s16
      %p18 = scmp.eq.s32.totalorder %s17, 0
      %s20 = sadd.s32 %s19, 1
      %s21 = scalar_select %p18, %s19, %s20
      %p24 = pneg %p18
      %p25 = scmp.eq.s32.totalorder %s9, 3
      %p26 = por %p24, %p25
      %p27 = scmp.ne.s32.totalorder %s19, %s22
      %p28 = scmp.eq.s32.totalorder %s9, 0
      %p29 = por %p27, %p28
      %p30 = scmp.ne.s32.totalorder %s19, %s22
      %p31 = scmp.eq.s32.totalorder %s14, 3
      %p32 = por %p30, %p31
      %p33 = scmp.ne.s32.totalorder %s22, %s23
      %p34 = scmp.eq.s32.totalorder %s14, 0
      %p35 = por %p33, %p34
      %p36 = scmp.ne.s32.totalorder %s22, %s23
      %p37 = scmp.eq.s32.totalorder %s15, 3
      %p38 = por %p36, %p37
      %p40 = scmp.ne.s32.totalorder %s23, %s39
      %p41 = scmp.eq.s32.totalorder %s15, 0
      %p42 = por %p40, %p41
      %s44 = sadd.s32 %s43, 1
      %p47 = scmp.eq.s32.totalorder %s9, 3
      %p48 = scmp.ne.s32.totalorder %s43, %s45
      %p49 = scmp.eq.s32.totalorder %s9, 0
      %p50 = por %p48, %p49
      %p51 = scmp.ne.s32.totalorder %s43, %s45
      %p52 = scmp.eq.s32.totalorder %s14, 3
      %p53 = por %p51, %p52
      %p54 = scmp.ne.s32.totalorder %s45, %s46
      %p55 = scmp.eq.s32.totalorder %s14, 0
      %p56 = por %p54, %p55
      %p57 = scmp.ne.s32.totalorder %s45, %s46
      %p58 = scmp.eq.s32.totalorder %s15, 3
      %p59 = por %p57, %p58
      %p61 = scmp.ne.s32.totalorder %s46, %s60
      %p62 = scmp.eq.s32.totalorder %s15, 0
      %p63 = por %p61, %p62
      %s65 = sadd.s32 %s64, 1
      %p68 = scmp.eq.s32.totalorder %s9, 3
      %p69 = scmp.ne.s32.totalorder %s64, %s66
      %p70 = scmp.eq.s32.totalorder %s9, 0
      %p71 = por %p69, %p70
      %p72 = scmp.ne.s32.totalorder %s64, %s66
      %p73 = scmp.eq.s32.totalorder %s14, 3
      %p74 = por %p72, %p73
      %p75 = scmp.ne.s32.totalorder %s66, %s67
      %p76 = scmp.eq.s32.totalorder %s14, 0
      %p77 = por %p75, %p76
      %p78 = scmp.ne.s32.totalorder %s66, %s67
      %p79 = scmp.eq.s32.totalorder %s15, 3
      %p80 = por %p78, %p79
      %p82 = scmp.ne.s32.totalorder %s67, %s81
      %p83 = scmp.eq.s32.totalorder %s15, 0
      %p84 = por %p82, %p83
      %s85 = ssub.s32 %s9, %s16
      %p86 = scmp.eq.s32.totalorder %s85, 0
      %s88 = sadd.s32 %s87, 1
      %s89 = scalar_select %p86, %s87, %s88
      %p92 = pneg %p86
      %p93 = scmp.eq.s32.totalorder %s9, 3
      %p94 = por %p92, %p93
      %p95 = scmp.ne.s32.totalorder %s87, %s90
      %p96 = scmp.eq.s32.totalorder %s9, 0
      %p97 = por %p95, %p96
      %p98 = scmp.ne.s32.totalorder %s87, %s90
      %p99 = scmp.eq.s32.totalorder %s14, 3
      %p100 = por %p98, %p99
      %p101 = scmp.ne.s32.totalorder %s90, %s91
      %p102 = scmp.eq.s32.totalorder %s14, 0
      %p103 = por %p101, %p102
      %p104 = scmp.ne.s32.totalorder %s90, %s91
      %p105 = scmp.eq.s32.totalorder %s15, 3
      %p106 = por %p104, %p105
      %p108 = scmp.ne.s32.totalorder %s91, %s107
      %p109 = scmp.eq.s32.totalorder %s15, 0
      %p110 = por %p108, %p109
      %p111 = scmp.le.s32.totalorder 1, %s9
      %p112 = scmp.lt.s32.totalorder %s9, 5
      %p113 = pnand %p111, %p112
      %p114 = pneg %p113
      // Predicated region
      $region9: #{input_process_forward.1} parent=5 // pred_check
        _
      $region10: #{input_process_forward.1} parent=5 // pred_check_branch
        %116 = sbr.rel (%p113) target = $region12
      $region11: #{input_process_forward.1} parent=5 // pred_region
        %s117 = ssub.s32 %s9, 1
        // Predicated region
        $region13: #{input_process_forward.1} parent=11 // pred_check
          %p118 = pneg %p56
        $region14: #{input_process_forward.1} parent=11 // pred_check_branch
          %120 = sbr.rel (%p118) target = $region16
        $region15: #{input_process_forward.1} parent=11 // pred_region
          _
        $region16: #{input_process_forward.1} parent=11 // pred_fallthru
          _
        // Predicated region
        $region17: #{input_process_forward.1} parent=11 // pred_check
          %p121 = pneg %p77
        $region18: #{input_process_forward.1} parent=11 // pred_check_branch
          %123 = sbr.rel (%p121) target = $region20
        $region19: #{input_process_forward.1} parent=11 // pred_region
          _
        $region20: #{input_process_forward.1} parent=11 // pred_fallthru
          _
      $region12: #{input_process_forward.1} parent=5 // pred_fallthru
        _
      %p124 = scmp.lt.s32.totalorder %s9, 4
      // Predicated region
      $region21: #{input_process_forward.1} parent=5 // pred_check
        %p125 = pneg %p124
      $region22: #{input_process_forward.1} parent=5 // pred_check_branch
        %127 = sbr.rel (%p125) target = $region24
      $region23: #{input_process_forward.1} parent=5 // pred_region
        // Predicated region
        $region25: #{input_process_forward.1} parent=23 // pred_check
          %p128 = pneg %p29
        $region26: #{input_process_forward.1} parent=23 // pred_check_branch
          %130 = sbr.rel (%p128) target = $region28
        $region27: #{input_process_forward.1} parent=23 // pred_region
          %s131 = sand.u32 %s19, 1
          %s132 = sand.u32 %s19, 1
          %s133 = smul.addr %s132, 128
          %s134 = scalar_lea.vmem [#allocation2], %s133
          %s135 = smul.u32 8, %s9
          %s136 = ssub.s32 25, %s135
          %p137 = scmp.lt.s32.totalorder %s136, 8
          %s138 = scalar_select %p137, %s136, 8
          %s139 = smul.u32 16, %s138
          %p140 = scmp.ne.s32.totalorder 0, %s139
          %s141 = smul.addr %s135, 8
          %s142 = scalar_lea.vmem %s0, %s141
          // Predicated region
          $region29: #{input_process_forward.1} parent=27 // pred_check
            %p143 = pneg %p140
          $region30: #{input_process_forward.1} parent=27 // pred_check_branch
            %145 = sbr.rel (%p143) target = $region32
          $region31: #{input_process_forward.1} parent=27 // pred_region
            // Predicated region
            $region33: #{input_process_forward.1} parent=31 // pred_check
              _
            $region34: #{input_process_forward.1} parent=31 // pred_check_branch
              %147 = sbr.rel (0) target = $region36
            $region35: #{input_process_forward.1} parent=31 // pred_region
              // Predicated region
              $region55: #{input_process_forward.1} parent=35 // pred_check
                _
              $region56: #{input_process_forward.1} parent=35 // pred_check_branch
                %229 = sbr.rel (0) target = $region58
              $region57: #{input_process_forward.1} parent=35 // pred_region
                %s230 = sshrl.u32 %s138, 3
                // While loop
                $region59: #{input_process_forward.1} parent=57 // loop_pre_header
                  _
                $region60: #{input_process_forward.1} parent=57 // loop_header
                  %s232 = sphi 0, %s234
                  %p233 = scmp.ge.s32.totalorder %s232, %s230
                  %s237 = sphi 0, %s274
                  %s238 = sphi %s142, %s277
                  %s239 = sphi %s134, %s278
                $region61: #{input_process_forward.1} parent=57 // loop_header_branch
                  %236 = sbr.rel (%p233) target = $region65
                $region62: #{input_process_forward.1} parent=57 // loop_body
                  %v240 = vld [vmem:[%s238] sm:$0xff]
                  %241 = vst [vmem:[%s239] sm:$0xff] %v240
                  %v242 = vld [vmem:[%s238 + $0x8] sm:$0xff]
                  %243 = vst [vmem:[%s239 + $0x8] sm:$0xff] %v242
                  %v244 = vld [vmem:[%s238 + $0x10] sm:$0xff]
                  %245 = vst [vmem:[%s239 + $0x10] sm:$0xff] %v244
                  %v246 = vld [vmem:[%s238 + $0x18] sm:$0xff]
                  %247 = vst [vmem:[%s239 + $0x18] sm:$0xff] %v246
                  %v248 = vld [vmem:[%s238 + $0x20] sm:$0xff]
                  %249 = vst [vmem:[%s239 + $0x20] sm:$0xff] %v248
                  %v250 = vld [vmem:[%s238 + $0x28] sm:$0xff]
                  %251 = vst [vmem:[%s239 + $0x28] sm:$0xff] %v250
                  %v252 = vld [vmem:[%s238 + $0x30] sm:$0xff]
                  %253 = vst [vmem:[%s239 + $0x30] sm:$0xff] %v252
                  %v254 = vld [vmem:[%s238 + $0x38] sm:$0xff]
                  %255 = vst [vmem:[%s239 + $0x38] sm:$0xff] %v254
                  %v256 = vld [vmem:[%s238 + $0xc8] sm:$0xff]
                  %257 = vst [vmem:[%s239 + $0x40] sm:$0xff] %v256
                  %v258 = vld [vmem:[%s238 + $0xd0] sm:$0xff]
                  %259 = vst [vmem:[%s239 + $0x48] sm:$0xff] %v258
                  %v260 = vld [vmem:[%s238 + $0xd8] sm:$0xff]
                  %261 = vst [vmem:[%s239 + $0x50] sm:$0xff] %v260
                  %v262 = vld [vmem:[%s238 + $0xe0] sm:$0xff]
                  %263 = vst [vmem:[%s239 + $0x58] sm:$0xff] %v262
                  %v264 = vld [vmem:[%s238 + $0xe8] sm:$0xff]
                  %265 = vst [vmem:[%s239 + $0x60] sm:$0xff] %v264
                  %v266 = vld [vmem:[%s238 + $0xf0] sm:$0xff]
                  %267 = vst [vmem:[%s239 + $0x68] sm:$0xff] %v266
                  %v268 = vld [vmem:[%s238 + $0xf8] sm:$0xff]
                  %269 = vst [vmem:[%s239 + $0x70] sm:$0xff] %v268
                  %v270 = vld [vmem:[%s238 + $0x100] sm:$0xff]
                  %271 = vst [vmem:[%s239 + $0x78] sm:$0xff] %v270
                  %s272 = sadd.s32 1, %s237
                  %p273 = scmp.ge.s32.totalorder %s272, %s230
                  %s274 = scalar_select %p273, 0, %s272
                  %s275 = smul.u32 %s274, 64
                  %s276 = smul.u32 %s274, 64
                  %s277 = scalar_lea.vmem %s142, %s275
                  %s278 = scalar_lea.vmem %s134, %s276 [#allocation2]
                $region63: #{input_process_forward.1} parent=57 // loop_footer
                  %s234 = sadd.s32 %s232, 1
                $region64: #{input_process_forward.1} parent=57 // loop_footer_branch
                  %231 = sbr.rel target = $region60
                $region65: #{input_process_forward.1} parent=57 // loop_exit
                  _
                %s279 = sshrl.u32 %s138, 3
                %s280 = sand.u32 %s138, 7
                %s281 = smul.u32 %s279, 8
                %s282 = smul.u32 8, %s281
                %s283 = scalar_lea.vmem %s142, %s282
                %s284 = smul.u32 8, %s281
                %s285 = scalar_lea.vmem %s134, %s284 [#allocation2]
                // While loop
                $region66: #{input_process_forward.1} parent=57 // loop_pre_header
                  _
                $region67: #{input_process_forward.1} parent=57 // loop_header
                  %s287 = sphi 0, %s289
                  %p288 = scmp.ge.s32.totalorder %s287, %s280
                  %s292 = sphi 0, %s301
                  %s293 = sphi %s283, %s304
                  %s294 = sphi %s285, %s305
                $region68: #{input_process_forward.1} parent=57 // loop_header_branch
                  %291 = sbr.rel (%p288) target = $region72
                $region69: #{input_process_forward.1} parent=57 // loop_body
                  %v295 = vld [vmem:[%s293] sm:$0xff]
                  %296 = vst [vmem:[%s294] sm:$0xff] %v295
                  %v297 = vld [vmem:[%s293 + $0xc8] sm:$0xff]
                  %298 = vst [vmem:[%s294 + $0x40] sm:$0xff] %v297
                  %s299 = sadd.s32 1, %s292
                  %p300 = scmp.ge.s32.totalorder %s299, %s280
                  %s301 = scalar_select %p300, 0, %s299
                  %s302 = smul.u32 %s301, 8
                  %s303 = smul.u32 %s301, 8
                  %s304 = scalar_lea.vmem %s283, %s302
                  %s305 = scalar_lea.vmem %s285, %s303 [#allocation2]
                $region70: #{input_process_forward.1} parent=57 // loop_footer
                  %s289 = sadd.s32 %s287, 1
                $region71: #{input_process_forward.1} parent=57 // loop_footer_branch
                  %286 = sbr.rel target = $region67
                $region72: #{input_process_forward.1} parent=57 // loop_exit
                  _
              $region58: #{input_process_forward.1} parent=35 // pred_fallthru
                _
              // Predicated region
              $region73: #{input_process_forward.1} parent=35 // pred_check
                _
              $region74: #{input_process_forward.1} parent=35 // pred_check_branch
                %307 = sbr.rel target = $region76
              $region75: #{input_process_forward.1} parent=35 // pred_region
                _
              $region76: #{input_process_forward.1} parent=35 // pred_fallthru
                _
            $region36: #{input_process_forward.1} parent=31 // pred_fallthru
              _
            // Predicated region
            $region37: #{input_process_forward.1} parent=31 // pred_check
              _
            $region38: #{input_process_forward.1} parent=31 // pred_check_branch
              %149 = sbr.rel target = $region40
            $region39: #{input_process_forward.1} parent=31 // pred_region
              %s151 = ssub.s32 256, 1
              %s152 = sshrl.u32 %s138, 3
              // While loop
              $region41: #{input_process_forward.1} parent=39 // loop_pre_header
                _
              $region42: #{input_process_forward.1} parent=39 // loop_header
                %s154 = sphi 0, %s156
                %p155 = scmp.ge.s32.totalorder %s154, %s152
                %s159 = sphi 0, %s196
                %s160 = sphi %s142, %s199
                %s161 = sphi %s134, %s200
              $region43: #{input_process_forward.1} parent=39 // loop_header_branch
                %158 = sbr.rel (%p155) target = $region47
              $region44: #{input_process_forward.1} parent=39 // loop_body
                %v162 = vld [vmem:[%s160] sm:%s151]
                %163 = vst [vmem:[%s161] sm:%s151] %v162
                %v164 = vld [vmem:[%s160 + $0x8] sm:%s151]
                %165 = vst [vmem:[%s161 + $0x8] sm:%s151] %v164
                %v166 = vld [vmem:[%s160 + $0x10] sm:%s151]
                %167 = vst [vmem:[%s161 + $0x10] sm:%s151] %v166
                %v168 = vld [vmem:[%s160 + $0x18] sm:%s151]
                %169 = vst [vmem:[%s161 + $0x18] sm:%s151] %v168
                %v170 = vld [vmem:[%s160 + $0x20] sm:%s151]
                %171 = vst [vmem:[%s161 + $0x20] sm:%s151] %v170
                %v172 = vld [vmem:[%s160 + $0x28] sm:%s151]
                %173 = vst [vmem:[%s161 + $0x28] sm:%s151] %v172
                %v174 = vld [vmem:[%s160 + $0x30] sm:%s151]
                %175 = vst [vmem:[%s161 + $0x30] sm:%s151] %v174
                %v176 = vld [vmem:[%s160 + $0x38] sm:%s151]
                %177 = vst [vmem:[%s161 + $0x38] sm:%s151] %v176
                %v178 = vld [vmem:[%s160 + $0xc8] sm:%s151]
                %179 = vst [vmem:[%s161 + $0x40] sm:%s151] %v178
                %v180 = vld [vmem:[%s160 + $0xd0] sm:%s151]
                %181 = vst [vmem:[%s161 + $0x48] sm:%s151] %v180
                %v182 = vld [vmem:[%s160 + $0xd8] sm:%s151]
                %183 = vst [vmem:[%s161 + $0x50] sm:%s151] %v182
                %v184 = vld [vmem:[%s160 + $0xe0] sm:%s151]
                %185 = vst [vmem:[%s161 + $0x58] sm:%s151] %v184
                %v186 = vld [vmem:[%s160 + $0xe8] sm:%s151]
                %187 = vst [vmem:[%s161 + $0x60] sm:%s151] %v186
                %v188 = vld [vmem:[%s160 + $0xf0] sm:%s151]
                %189 = vst [vmem:[%s161 + $0x68] sm:%s151] %v188
                %v190 = vld [vmem:[%s160 + $0xf8] sm:%s151]
                %191 = vst [vmem:[%s161 + $0x70] sm:%s151] %v190
                %v192 = vld [vmem:[%s160 + $0x100] sm:%s151]
                %193 = vst [vmem:[%s161 + $0x78] sm:%s151] %v192
                %s194 = sadd.s32 1, %s159
                %p195 = scmp.ge.s32.totalorder %s194, %s152
                %s196 = scalar_select %p195, 0, %s194
                %s197 = smul.u32 %s196, 64
                %s198 = smul.u32 %s196, 64
                %s199 = scalar_lea.vmem %s142, %s197
                %s200 = scalar_lea.vmem %s134, %s198 [#allocation2]
              $region45: #{input_process_forward.1} parent=39 // loop_footer
                %s156 = sadd.s32 %s154, 1
              $region46: #{input_process_forward.1} parent=39 // loop_footer_branch
                %153 = sbr.rel target = $region42
              $region47: #{input_process_forward.1} parent=39 // loop_exit
                _
              %s201 = sshrl.u32 %s138, 3
              %s202 = sand.u32 %s138, 7
              %s203 = smul.u32 %s201, 8
              %s204 = smul.u32 8, %s203
              %s205 = scalar_lea.vmem %s142, %s204
              %s206 = smul.u32 8, %s203
              %s207 = scalar_lea.vmem %s134, %s206 [#allocation2]
              // While loop
              $region48: #{input_process_forward.1} parent=39 // loop_pre_header
                _
              $region49: #{input_process_forward.1} parent=39 // loop_header
                %s209 = sphi 0, %s211
                %p210 = scmp.ge.s32.totalorder %s209, %s202
                %s214 = sphi 0, %s223
                %s215 = sphi %s205, %s226
                %s216 = sphi %s207, %s227
              $region50: #{input_process_forward.1} parent=39 // loop_header_branch
                %213 = sbr.rel (%p210) target = $region54
              $region51: #{input_process_forward.1} parent=39 // loop_body
                %v217 = vld [vmem:[%s215] sm:%s151]
                %218 = vst [vmem:[%s216] sm:%s151] %v217
                %v219 = vld [vmem:[%s215 + $0xc8] sm:%s151]
                %220 = vst [vmem:[%s216 + $0x40] sm:%s151] %v219
                %s221 = sadd.s32 1, %s214
                %p222 = scmp.ge.s32.totalorder %s221, %s202
                %s223 = scalar_select %p222, 0, %s221
                %s224 = smul.u32 %s223, 8
                %s225 = smul.u32 %s223, 8
                %s226 = scalar_lea.vmem %s205, %s224
                %s227 = scalar_lea.vmem %s207, %s225 [#allocation2]
              $region52: #{input_process_forward.1} parent=39 // loop_footer
                %s211 = sadd.s32 %s209, 1
              $region53: #{input_process_forward.1} parent=39 // loop_footer_branch
                %208 = sbr.rel target = $region49
              $region54: #{input_process_forward.1} parent=39 // loop_exit
                _
            $region40: #{input_process_forward.1} parent=31 // pred_fallthru
              _
          $region32: #{input_process_forward.1} parent=27 // pred_fallthru
            _
          %308 = vnop
        $region28: #{input_process_forward.1} parent=23 // pred_fallthru
          _
      $region24: #{input_process_forward.1} parent=5 // pred_fallthru
        _
      %p309 = scmp.le.s32.totalorder 1, %s9
      %p310 = scmp.lt.s32.totalorder %s9, 5
      %p311 = pnand %p309, %p310
      %p312 = pneg %p311
      // Predicated region
      $region77: #{input_process_forward.1} parent=5 // pred_check
        _
      $region78: #{input_process_forward.1} parent=5 // pred_check_branch
        %314 = sbr.rel (%p311) target = $region80
      $region79: #{input_process_forward.1} parent=5 // pred_region
        %s315 = ssub.s32 %s9, 1
        %s316 = sand.u32 %s22, 1
        %s317 = sand.u32 %s22, 1
        %s318 = smul.addr %s317, 128
        %s319 = scalar_lea.vmem [#allocation2], %s318
        // Predicated region
        $region81: #{input_process_forward.1} parent=79 // pred_check
          %p320 = pneg %p35
        $region82: #{input_process_forward.1} parent=79 // pred_check_branch
          %322 = sbr.rel (%p320) target = $region84
        $region83: #{input_process_forward.1} parent=79 // pred_region
          _
        $region84: #{input_process_forward.1} parent=79 // pred_fallthru
          _
        %s323 = sand.u32 %s22, 1
        %s324 = sand.u32 %s22, 1
        %s325 = smul.addr %s324, 128
        %s326 = scalar_lea.vmem [#allocation2], %s325
        %p327 = pneg %p35
        %p328 = pneg %p32
        %p329 = pneg %p56
        %p330 = pneg %p53
        %p331 = pneg %p77
        %p332 = pneg %p74
        %p333 = pneg %p103
        %p334 = pneg %p100
        %s335 = sand.u32 %s90, 1
        %s336 = sand.u32 %s90, 1
        %s337 = smul.addr %s336, 64
        %s338 = scalar_lea.vmem [#allocation3], %s337
        %s339 = smul.u32 8, %s14
        %s340 = ssub.s32 25, %s339
        %p341 = scmp.lt.s32.totalorder %s340, 8
        %s342 = scalar_select %p341, %s340, 8
        %s343 = smul.u32 16, %s342
        %s344 = smul.u32 8, %s14
        %s345 = ssub.s32 25, %s344
        %p346 = scmp.lt.s32.totalorder %s345, 8
        %s347 = scalar_select %p346, %s345, 8
        %s348 = smul.u32 8, %s347
        %v349 = vld [vmem:[%s1] sm:$0xff]
        %v350 = vld [vmem:[%s1 + $0x8] sm:$0xff]
        %v351 = vld [vmem:[%s1 + $0x10] sm:$0xff]
        %v352 = vld [vmem:[%s1 + $0x18] sm:$0xff]
        %v353 = vld [vmem:[%s2] sm:$0x1]
        %v354 = vld [vmem:[%s319] sm:$0xff]
        %v355 = vld [vmem:[%s319 + $0x8] sm:$0xff]
        %v356 = vld [vmem:[%s319 + $0x10] sm:$0xff]
        %v357 = vld [vmem:[%s319 + $0x18] sm:$0xff]
        %v358 = vld [vmem:[%s319 + $0x20] sm:$0xff]
        %v359 = vld [vmem:[%s319 + $0x28] sm:$0xff]
        %v360 = vld [vmem:[%s319 + $0x30] sm:$0xff]
        %v361 = vld [vmem:[%s319 + $0x38] sm:$0xff]
        %v363 = vperm.slane %v353, 0
        %vm365 = vcmask 261120
        %v367 = vsel %vm365, %v354, 0
        %v370 = vsel %vm365, %v355, 0
        %v373 = vsel %vm365, %v356, 0
        %v376 = vsel %vm365, %v357, 0
        %v379 = vsel %vm365, %v358, 0
        %v382 = vsel %vm365, %v359, 0
        %v385 = vsel %vm365, %v360, 0
        %v388 = vsel %vm365, %v361, 0
        %390 = vmatpush.msra.mxu0 0.0
        %391 = vmatpush.msra.mxu0 0.0
        %392 = vmatpush.msra.mxu0 0.0
        %393 = vmatpush.msra.mxu0 0.0
        %394 = vmatpush.msra.mxu0 0.0
        %395 = vmatpush.msra.mxu0 0.0
        %396 = vmatpush.msra.mxu0 0.0
        %397 = vmatpush.msra.mxu0 0.0
        %398 = vmatpush.msra.mxu0 0.0
        %399 = vmatpush.msra.mxu0 0.0
        %400 = vmatpush.msra.mxu0 0.0
        %401 = vmatpush.msra.mxu0 0.0
        %402 = vmatpush.msra.mxu0 %v352
        %403 = vmatpush.msra.mxu0 %v351
        %404 = vmatpush.msra.mxu0 %v350
        %405 = vmatpush.msra.mxu0 %v349
        %406 = vmatmul.f32.gmra.mxu0 %v367
        %v407 = vpop.f32.mrf.mxu0
        %v408 = vadd.f32 %v363, %v407
        %409 = vmatmul.f32.gmra.mxu0 %v370
        %v410 = vpop.f32.mrf.mxu0
        %v411 = vadd.f32 %v363, %v410
        %412 = vmatmul.f32.gmra.mxu0 %v373
        %v413 = vpop.f32.mrf.mxu0
        %v414 = vadd.f32 %v363, %v413
        %415 = vmatmul.f32.gmra.mxu0 %v376
        %v416 = vpop.f32.mrf.mxu0
        %v417 = vadd.f32 %v363, %v416
        %418 = vmatmul.f32.gmra.mxu0 %v379
        %v419 = vpop.f32.mrf.mxu0
        %v420 = vadd.f32 %v363, %v419
        %421 = vmatmul.f32.gmra.mxu0 %v382
        %v422 = vpop.f32.mrf.mxu0
        %v423 = vadd.f32 %v363, %v422
        %424 = vmatmul.f32.gmra.mxu0 %v385
        %v425 = vpop.f32.mrf.mxu0
        %v426 = vadd.f32 %v363, %v425
        %427 = vmatmul.f32.gmra.mxu0 %v388
        %v428 = vpop.f32.mrf.mxu0
        %v429 = vadd.f32 %v363, %v428
        %430 = vdwg.mxu0
        %s431 = scalar_lea.vmem %s319, 64 [#allocation2]
        %v432 = vld [vmem:[%s431] sm:$0xff]
        %v433 = vld [vmem:[%s431 + $0x8] sm:$0xff]
        %v434 = vld [vmem:[%s431 + $0x10] sm:$0xff]
        %v435 = vld [vmem:[%s431 + $0x18] sm:$0xff]
        %v436 = vld [vmem:[%s431 + $0x20] sm:$0xff]
        %v437 = vld [vmem:[%s431 + $0x28] sm:$0xff]
        %v438 = vld [vmem:[%s431 + $0x30] sm:$0xff]
        %v439 = vld [vmem:[%s431 + $0x38] sm:$0xff]
        %v441 = vsel %vm365, %v432, 0
        %v444 = vsel %vm365, %v433, 0
        %v447 = vsel %vm365, %v434, 0
        %v450 = vsel %vm365, %v435, 0
        %v453 = vsel %vm365, %v436, 0
        %v456 = vsel %vm365, %v437, 0
        %v459 = vsel %vm365, %v438, 0
        %v462 = vsel %vm365, %v439, 0
        %464 = vmatpush.msra.mxu0 0.0
        %465 = vmatpush.msra.mxu0 0.0
        %466 = vmatpush.msra.mxu0 0.0
        %467 = vmatpush.msra.mxu0 0.0
        %468 = vmatpush.msra.mxu0 0.0
        %469 = vmatpush.msra.mxu0 0.0
        %470 = vmatpush.msra.mxu0 0.0
        %471 = vmatpush.msra.mxu0 0.0
        %472 = vmatpush.msra.mxu0 0.0
        %473 = vmatpush.msra.mxu0 0.0
        %474 = vmatpush.msra.mxu0 0.0
        %475 = vmatpush.msra.mxu0 0.0
        %476 = vmatpush.msra.mxu0 %v352
        %477 = vmatpush.msra.mxu0 %v351
        %478 = vmatpush.msra.mxu0 %v350
        %479 = vmatpush.msra.mxu0 %v349
        %480 = vmatmul.f32.gmra.mxu0 %v441
        %v481 = vpop.f32.mrf.mxu0
        %v482 = vadd.f32 %v363, %v481
        %483 = vmatmul.f32.gmra.mxu0 %v444
        %v484 = vpop.f32.mrf.mxu0
        %v485 = vadd.f32 %v363, %v484
        %486 = vmatmul.f32.gmra.mxu0 %v447
        %v487 = vpop.f32.mrf.mxu0
        %v488 = vadd.f32 %v363, %v487
        %489 = vmatmul.f32.gmra.mxu0 %v450
        %v490 = vpop.f32.mrf.mxu0
        %v491 = vadd.f32 %v363, %v490
        %492 = vmatmul.f32.gmra.mxu0 %v453
        %v493 = vpop.f32.mrf.mxu0
        %v494 = vadd.f32 %v363, %v493
        %495 = vmatmul.f32.gmra.mxu0 %v456
        %v496 = vpop.f32.mrf.mxu0
        %v497 = vadd.f32 %v363, %v496
        %498 = vmatmul.f32.gmra.mxu0 %v459
        %v499 = vpop.f32.mrf.mxu0
        %v500 = vadd.f32 %v363, %v499
        %501 = vmatmul.f32.gmra.mxu0 %v462
        %v502 = vpop.f32.mrf.mxu0
        %v503 = vadd.f32 %v363, %v502
        %504 = vdwg.mxu0
        %513 = vrot.lane.b32.xlu0 %v482, 64
        %v514 = vpop.permute.xlu0 %513
        %515 = vrot.lane.b32.xlu0 %v485, 64
        %v516 = vpop.permute.xlu0 %515
        %517 = vrot.lane.b32.xlu0 %v488, 64
        %v518 = vpop.permute.xlu0 %517
        %519 = vrot.lane.b32.xlu0 %v491, 64
        %v520 = vpop.permute.xlu0 %519
        %521 = vrot.lane.b32.xlu0 %v494, 64
        %v522 = vpop.permute.xlu0 %521
        %523 = vrot.lane.b32.xlu0 %v497, 64
        %v524 = vpop.permute.xlu0 %523
        %525 = vrot.lane.b32.xlu0 %v500, 64
        %v526 = vpop.permute.xlu0 %525
        %527 = vrot.lane.b32.xlu0 %v503, 64
        %v528 = vpop.permute.xlu0 %527
        %vm537 = vcmask 523264
        %v538 = vsel %vm537, %v408, %v514
        %v539 = vsel %vm537, %v411, %v516
        %v540 = vsel %vm537, %v414, %v518
        %v541 = vsel %vm537, %v417, %v520
        %v542 = vsel %vm537, %v420, %v522
        %v543 = vsel %vm537, %v423, %v524
        %v544 = vsel %vm537, %v426, %v526
        %v545 = vsel %vm537, %v429, %v528
        %546 = vst [vmem:[%s338] sm:$0xff] %v538
        %547 = vst [vmem:[%s338 + $0x8] sm:$0xff] %v539
        %548 = vst [vmem:[%s338 + $0x10] sm:$0xff] %v540
        %549 = vst [vmem:[%s338 + $0x18] sm:$0xff] %v541
        %550 = vst [vmem:[%s338 + $0x20] sm:$0xff] %v542
        %551 = vst [vmem:[%s338 + $0x28] sm:$0xff] %v543
        %552 = vst [vmem:[%s338 + $0x30] sm:$0xff] %v544
        %553 = vst [vmem:[%s338 + $0x38] sm:$0xff] %v545
        %s554 = sand.u32 %s90, 1
        %s555 = sand.u32 %s90, 1
        %s556 = smul.addr %s555, 64
        %s557 = scalar_lea.vmem [#allocation3], %s556
        // Predicated region
        $region85: #{input_process_forward.1} parent=79 // pred_check
          %p558 = pneg %p100
        $region86: #{input_process_forward.1} parent=79 // pred_check_branch
          %560 = sbr.rel (%p558) target = $region88
        $region87: #{input_process_forward.1} parent=79 // pred_region
          %s561 = smul.u32 8, %s14
          %s562 = ssub.s32 25, %s561
          %p563 = scmp.lt.s32.totalorder %s562, 8
          %s564 = scalar_select %p563, %s562, 8
          %s565 = smul.u32 8, %s564
          %p566 = scmp.ne.s32.totalorder 0, %s565
          %s567 = smul.addr %s561, 8
          %s568 = scalar_lea.vmem %s3, %s567
          // Predicated region
          $region89: #{input_process_forward.1} parent=87 // pred_check
            %p569 = pneg %p566
          $region90: #{input_process_forward.1} parent=87 // pred_check_branch
            %571 = sbr.rel (%p569) target = $region92
          $region91: #{input_process_forward.1} parent=87 // pred_region
            // Predicated region
            $region93: #{input_process_forward.1} parent=91 // pred_check
              _
            $region94: #{input_process_forward.1} parent=91 // pred_check_branch
              %573 = sbr.rel (0) target = $region96
            $region95: #{input_process_forward.1} parent=91 // pred_region
              // Predicated region
              $region115: #{input_process_forward.1} parent=95 // pred_check
                _
              $region116: #{input_process_forward.1} parent=95 // pred_check_branch
                %637 = sbr.rel (0) target = $region118
              $region117: #{input_process_forward.1} parent=95 // pred_region
                %s638 = sshrl.u32 %s564, 3
                // While loop
                $region119: #{input_process_forward.1} parent=117 // loop_pre_header
                  _
                $region120: #{input_process_forward.1} parent=117 // loop_header
                  %s640 = sphi 0, %s642
                  %p641 = scmp.ge.s32.totalorder %s640, %s638
                  %s645 = sphi 0, %s666
                  %s646 = sphi %s557, %s669
                  %s647 = sphi %s568, %s670
                $region121: #{input_process_forward.1} parent=117 // loop_header_branch
                  %644 = sbr.rel (%p641) target = $region125
                $region122: #{input_process_forward.1} parent=117 // loop_body
                  %v648 = vld [vmem:[%s646] sm:$0xff]
                  %649 = vst [vmem:[%s647] sm:$0xff] %v648
                  %v650 = vld [vmem:[%s646 + $0x8] sm:$0xff]
                  %651 = vst [vmem:[%s647 + $0x8] sm:$0xff] %v650
                  %v652 = vld [vmem:[%s646 + $0x10] sm:$0xff]
                  %653 = vst [vmem:[%s647 + $0x10] sm:$0xff] %v652
                  %v654 = vld [vmem:[%s646 + $0x18] sm:$0xff]
                  %655 = vst [vmem:[%s647 + $0x18] sm:$0xff] %v654
                  %v656 = vld [vmem:[%s646 + $0x20] sm:$0xff]
                  %657 = vst [vmem:[%s647 + $0x20] sm:$0xff] %v656
                  %v658 = vld [vmem:[%s646 + $0x28] sm:$0xff]
                  %659 = vst [vmem:[%s647 + $0x28] sm:$0xff] %v658
                  %v660 = vld [vmem:[%s646 + $0x30] sm:$0xff]
                  %661 = vst [vmem:[%s647 + $0x30] sm:$0xff] %v660
                  %v662 = vld [vmem:[%s646 + $0x38] sm:$0xff]
                  %663 = vst [vmem:[%s647 + $0x38] sm:$0xff] %v662
                  %s664 = sadd.s32 1, %s645
                  %p665 = scmp.ge.s32.totalorder %s664, %s638
                  %s666 = scalar_select %p665, 0, %s664
                  %s667 = smul.u32 %s666, 64
                  %s668 = smul.u32 %s666, 64
                  %s669 = scalar_lea.vmem %s557, %s667 [#allocation3]
                  %s670 = scalar_lea.vmem %s568, %s668
                $region123: #{input_process_forward.1} parent=117 // loop_footer
                  %s642 = sadd.s32 %s640, 1
                $region124: #{input_process_forward.1} parent=117 // loop_footer_branch
                  %639 = sbr.rel target = $region120
                $region125: #{input_process_forward.1} parent=117 // loop_exit
                  _
                %s671 = sshrl.u32 %s564, 3
                %s672 = sand.u32 %s564, 7
                %s673 = smul.u32 %s671, 8
                %s674 = smul.u32 8, %s673
                %s675 = scalar_lea.vmem %s557, %s674 [#allocation3]
                %s676 = smul.u32 8, %s673
                %s677 = scalar_lea.vmem %s568, %s676
                // While loop
                $region126: #{input_process_forward.1} parent=117 // loop_pre_header
                  _
                $region127: #{input_process_forward.1} parent=117 // loop_header
                  %s679 = sphi 0, %s681
                  %p680 = scmp.ge.s32.totalorder %s679, %s672
                  %s684 = sphi 0, %s691
                  %s685 = sphi %s675, %s694
                  %s686 = sphi %s677, %s695
                $region128: #{input_process_forward.1} parent=117 // loop_header_branch
                  %683 = sbr.rel (%p680) target = $region132
                $region129: #{input_process_forward.1} parent=117 // loop_body
                  %v687 = vld [vmem:[%s685] sm:$0xff]
                  %688 = vst [vmem:[%s686] sm:$0xff] %v687
                  %s689 = sadd.s32 1, %s684
                  %p690 = scmp.ge.s32.totalorder %s689, %s672
                  %s691 = scalar_select %p690, 0, %s689
                  %s692 = smul.u32 %s691, 8
                  %s693 = smul.u32 %s691, 8
                  %s694 = scalar_lea.vmem %s675, %s692 [#allocation3]
                  %s695 = scalar_lea.vmem %s677, %s693
                $region130: #{input_process_forward.1} parent=117 // loop_footer
                  %s681 = sadd.s32 %s679, 1
                $region131: #{input_process_forward.1} parent=117 // loop_footer_branch
                  %678 = sbr.rel target = $region127
                $region132: #{input_process_forward.1} parent=117 // loop_exit
                  _
              $region118: #{input_process_forward.1} parent=95 // pred_fallthru
                _
              // Predicated region
              $region133: #{input_process_forward.1} parent=95 // pred_check
                _
              $region134: #{input_process_forward.1} parent=95 // pred_check_branch
                %697 = sbr.rel target = $region136
              $region135: #{input_process_forward.1} parent=95 // pred_region
                _
              $region136: #{input_process_forward.1} parent=95 // pred_fallthru
                _
            $region96: #{input_process_forward.1} parent=91 // pred_fallthru
              _
            // Predicated region
            $region97: #{input_process_forward.1} parent=91 // pred_check
              _
            $region98: #{input_process_forward.1} parent=91 // pred_check_branch
              %575 = sbr.rel target = $region100
            $region99: #{input_process_forward.1} parent=91 // pred_region
              %s577 = ssub.s32 256, 1
              %s578 = sshrl.u32 %s564, 3
              // While loop
              $region101: #{input_process_forward.1} parent=99 // loop_pre_header
                _
              $region102: #{input_process_forward.1} parent=99 // loop_header
                %s580 = sphi 0, %s582
                %p581 = scmp.ge.s32.totalorder %s580, %s578
                %s585 = sphi 0, %s606
                %s586 = sphi %s557, %s609
                %s587 = sphi %s568, %s610
              $region103: #{input_process_forward.1} parent=99 // loop_header_branch
                %584 = sbr.rel (%p581) target = $region107
              $region104: #{input_process_forward.1} parent=99 // loop_body
                %v588 = vld [vmem:[%s586] sm:%s577]
                %589 = vst [vmem:[%s587] sm:%s577] %v588
                %v590 = vld [vmem:[%s586 + $0x8] sm:%s577]
                %591 = vst [vmem:[%s587 + $0x8] sm:%s577] %v590
                %v592 = vld [vmem:[%s586 + $0x10] sm:%s577]
                %593 = vst [vmem:[%s587 + $0x10] sm:%s577] %v592
                %v594 = vld [vmem:[%s586 + $0x18] sm:%s577]
                %595 = vst [vmem:[%s587 + $0x18] sm:%s577] %v594
                %v596 = vld [vmem:[%s586 + $0x20] sm:%s577]
                %597 = vst [vmem:[%s587 + $0x20] sm:%s577] %v596
                %v598 = vld [vmem:[%s586 + $0x28] sm:%s577]
                %599 = vst [vmem:[%s587 + $0x28] sm:%s577] %v598
                %v600 = vld [vmem:[%s586 + $0x30] sm:%s577]
                %601 = vst [vmem:[%s587 + $0x30] sm:%s577] %v600
                %v602 = vld [vmem:[%s586 + $0x38] sm:%s577]
                %603 = vst [vmem:[%s587 + $0x38] sm:%s577] %v602
                %s604 = sadd.s32 1, %s585
                %p605 = scmp.ge.s32.totalorder %s604, %s578
                %s606 = scalar_select %p605, 0, %s604
                %s607 = smul.u32 %s606, 64
                %s608 = smul.u32 %s606, 64
                %s609 = scalar_lea.vmem %s557, %s607 [#allocation3]
                %s610 = scalar_lea.vmem %s568, %s608
              $region105: #{input_process_forward.1} parent=99 // loop_footer
                %s582 = sadd.s32 %s580, 1
              $region106: #{input_process_forward.1} parent=99 // loop_footer_branch
                %579 = sbr.rel target = $region102
              $region107: #{input_process_forward.1} parent=99 // loop_exit
                _
              %s611 = sshrl.u32 %s564, 3
              %s612 = sand.u32 %s564, 7
              %s613 = smul.u32 %s611, 8
              %s614 = smul.u32 8, %s613
              %s615 = scalar_lea.vmem %s557, %s614 [#allocation3]
              %s616 = smul.u32 8, %s613
              %s617 = scalar_lea.vmem %s568, %s616
              // While loop
              $region108: #{input_process_forward.1} parent=99 // loop_pre_header
                _
              $region109: #{input_process_forward.1} parent=99 // loop_header
                %s619 = sphi 0, %s621
                %p620 = scmp.ge.s32.totalorder %s619, %s612
                %s624 = sphi 0, %s631
                %s625 = sphi %s615, %s634
                %s626 = sphi %s617, %s635
              $region110: #{input_process_forward.1} parent=99 // loop_header_branch
                %623 = sbr.rel (%p620) target = $region114
              $region111: #{input_process_forward.1} parent=99 // loop_body
                %v627 = vld [vmem:[%s625] sm:%s577]
                %628 = vst [vmem:[%s626] sm:%s577] %v627
                %s629 = sadd.s32 1, %s624
                %p630 = scmp.ge.s32.totalorder %s629, %s612
                %s631 = scalar_select %p630, 0, %s629
                %s632 = smul.u32 %s631, 8
                %s633 = smul.u32 %s631, 8
                %s634 = scalar_lea.vmem %s615, %s632 [#allocation3]
                %s635 = scalar_lea.vmem %s617, %s633
              $region112: #{input_process_forward.1} parent=99 // loop_footer
                %s621 = sadd.s32 %s619, 1
              $region113: #{input_process_forward.1} parent=99 // loop_footer_branch
                %618 = sbr.rel target = $region109
              $region114: #{input_process_forward.1} parent=99 // loop_exit
                _
            $region100: #{input_process_forward.1} parent=91 // pred_fallthru
              _
          $region92: #{input_process_forward.1} parent=87 // pred_fallthru
            _
          %698 = vnop
        $region88: #{input_process_forward.1} parent=79 // pred_fallthru
          _
      $region80: #{input_process_forward.1} parent=5 // pred_fallthru
        _
      %p699 = scmp.le.s32.totalorder 2, %s9
      // Predicated region
      $region137: #{input_process_forward.1} parent=5 // pred_check
        %p700 = pneg %p699
      $region138: #{input_process_forward.1} parent=5 // pred_check_branch
        %702 = sbr.rel (%p700) target = $region140
      $region139: #{input_process_forward.1} parent=5 // pred_region
        %s703 = ssub.s32 %s9, 2
        // Predicated region
        $region141: #{input_process_forward.1} parent=139 // pred_check
          %p704 = pneg %p106
        $region142: #{input_process_forward.1} parent=139 // pred_check_branch
          %706 = sbr.rel (%p704) target = $region144
        $region143: #{input_process_forward.1} parent=139 // pred_region
          %s707 = sand.u32 %s91, 1
          %s708 = sand.u32 %s91, 1
          %s709 = smul.addr %s708, 64
          %s710 = scalar_lea.vmem [#allocation3], %s709
        $region144: #{input_process_forward.1} parent=139 // pred_fallthru
          _
      $region140: #{input_process_forward.1} parent=5 // pred_fallthru
        _
    $region6: #{input_process_forward.1} parent=1 // loop_footer
      %s13 = sadd.s32 1, %s9
    $region7: #{input_process_forward.1} parent=1 // loop_footer_branch
      %8 = sbr.rel target = $region3
    $region8: #{input_process_forward.1} parent=1 // loop_exit
      _

</llo_original>
